<compile_context>
chip_gen: v6e
topology: v6e:2x2x1
jax: 0.10.0
libtpu: 0.0.40
codegen_flags: <defaults>
</compile_context>

<pallas_src>
import jax
import jax.numpy as jnp
from jax.experimental import pallas as pl
from jax.experimental.pallas import tpu as pltpu


# ----------------------------- small helpers --------------------------------

def _round_up(x, m):
    return (x + m - 1) // m * m


def _sublane(dtype):
    return {4: 8, 2: 16, 1: 32}.get(jnp.dtype(dtype).itemsize, 8)


def _vmem_capacity_bytes():
    """Physical VMEM per core (falls back to 128 MiB if the query fails)."""
    try:
        info = pltpu.get_tpu_info()
        cap = getattr(info, "vmem_capacity_bytes", None)
        if cap:
            return int(cap)
    except Exception:
        pass
    return 128 * 1024 * 1024


def _vmem_limit_bytes():
    # ~100 MiB on 128 MiB parts (v5e/v6e), ~56 MiB on 64 MiB parts (v7x):
    # leave headroom for compiler-internal scratch/spill.
    cap = _vmem_capacity_bytes()
    return max(32 * 1024 * 1024,
               min(100 * 1024 * 1024, cap - 8 * 1024 * 1024))


def _pick_th(th_req, h_pad, d_pad, dout_pad, cd_size, weight_budget):
    """Largest multiple-of-128 divisor of h_pad <= th_req that fits VMEM."""
    th = max(128, min(th_req, h_pad))
    th = (th // 128) * 128
    while h_pad % th:
        th -= 128
    # Shrink further if the double-buffered weight blocks alone would blow VMEM.
    while th > 128 and 2 * (2 * d_pad + dout_pad) * th * cd_size > weight_budget:
        nt = th - 128
        while h_pad % nt:
            nt -= 128
        th = nt
    return th


def _pick_tm(m, d_pad, dout_pad, th, sub, cd_size, out_size, vmem_budget,
             use_acc_scratch, tm_req):
    """Row tile sized for arithmetic intensity, capped by VMEM, balanced over M."""
    def footprint(tm):
        f = 2 * tm * d_pad * cd_size              # x tile (double-buffered)
        f += 2 * d_pad * (2 * th) * cd_size       # fused fc1 weight tile
        f += 2 * th * dout_pad * cd_size          # fc2 weight tile
        f += 2 * tm * dout_pad * out_size         # output tile
        if use_acc_scratch:
            f += tm * dout_pad * 4                # f32 accumulator scratch
        return f

    tm = max(sub, min(_round_up(tm_req, sub), _round_up(m, sub)))
    while tm > sub and footprint(tm) > vmem_budget:
        tm = _round_up(max(sub, tm // 2), sub)

    # Balance row tiles (minimal zero-row padding); guarantee >=2 parallel
    # i-tiles when M is large so both v7x TensorCores get work.
    n_i = pl.cdiv(m, tm)
    if n_i == 1 and m >= 512:
        n_i = 2
    tm = _round_up(pl.cdiv(m, n_i), sub)
    return tm, n_i * tm


# --------------------------------- kernel -----------------------------------

def _gated_mlp_kernel(x_ref, w1f_ref, w2t_ref, o_ref, *acc):
    # x_ref:   (tm, Dp)
    # w1f_ref: (Dp, 2*th)   -- [value tile | gate tile] for hidden tile j
    # w2t_ref: (th, Doutp)  -- fc2 weight (transposed) tile for hidden tile j
    # o_ref:   (tm, Doutp)  -- output block, constant over the hidden axis
    # acc:     ()           -- f32 output: accumulate directly into o_ref
    #          (acc_ref,)   -- otherwise: f32 accumulator scratch
    acc_ref = acc[0] if acc else o_ref
    j = pl.program_id(1)

    @pl.when(j == 0)
    def _():
        acc_ref[...] = jnp.zeros_like(acc_ref)

    th = w2t_ref.shape[0]

    # Single fused fc1 matmul for this hidden tile: (tm, 2*th), f32 accumulate.
    yz = jnp.dot(x_ref[...], w1f_ref[...], preferred_element_type=jnp.float32)
    y = yz[:, :th]
    gate = yz[:, th:]

    # SwiGLU gating in f32: one EUP sigmoid + two VPU multiplies.
    h = y * (gate * jax.nn.sigmoid(gate))

    # fc2 partial product for this hidden tile, accumulated in f32.
    acc_ref[...] += jnp.dot(
        h.astype(w2t_ref.dtype), w2t_ref[...], preferred_element_type=jnp.float32
    )

    if acc:  # separate scratch only when the output dtype is not f32
        @pl.when(j == pl.num_programs(1) - 1)
        def _():
            o_ref[...] = acc_ref[...].astype(o_ref.dtype)


# ----------------------------- weight packing -------------------------------

def pack_gated_mlp_weights(w1, w2, *, th_req=None, compute_dtype=None):
    """One-time weight repack (hoisted off the per-call hot path).

    Returns (w1f, w2t, meta): fc1 halves transposed to (Dp, Hp), zero-padded
    and interleaved per hidden tile as [value|gate] blocks of width 2*th, and
    fc2 transposed/padded to (Hp, Doutp).
    """
    two_h, d = w1.shape
    hdim = two_h // 2
    d_out = w2.shape[0]
    compute_dtype = jnp.dtype(compute_dtype if compute_dtype is not None else w1.dtype)
    cd_size = compute_dtype.itemsize

    d_pad = _round_up(d, 128)
    h_pad = _round_up(hdim, 128)
    dout_pad = _round_up(d_out, 128)

    vmem_limit = _vmem_limit_bytes()
    if th_req is None:
        # Smaller hidden tile on 64 MiB-VMEM parts (v7x), larger elsewhere.
        th_req = 256 if _vmem_capacity_bytes() <= 64 * 1024 * 1024 else 512
    th = _pick_th(th_req, h_pad, d_pad, dout_pad, cd_size, vmem_limit // 2)

    w1c = w1.astype(compute_dtype)
    w2c = w2.astype(compute_dtype)
    w1y = jnp.zeros((d_pad, h_pad), compute_dtype).at[:d, :hdim].set(w1c[:hdim].T)
    w1g = jnp.zeros((d_pad, h_pad), compute_dtype).at[:d, :hdim].set(w1c[hdim:].T)
    n_h = h_pad // th  # exact by construction of th
    w1f = jnp.concatenate(
        [w1y.reshape(d_pad, n_h, th), w1g.reshape(d_pad, n_h, th)], axis=2
    ).reshape(d_pad, 2 * h_pad)
    w2t = jnp.zeros((h_pad, dout_pad), compute_dtype).at[:hdim, :d_out].set(w2c.T)

    meta = dict(d=d, hdim=hdim, d_out=d_out, th=th, compute_dtype=compute_dtype)
    return w1f, w2t, meta


# ------------------------------- forward pass --------------------------------

def _gated_mlp_packed(x, w1f, w2t, *, d, hdim, d_out, th, compute_dtype,
                      tm_req=None):
    orig_shape = x.shape
    assert orig_shape[-1] == d, "last dim of x must equal in_features"
    out_dtype = x.dtype
    x2d = x.reshape(-1, d).astype(compute_dtype)
    m = x2d.shape[0]

    d_pad = w1f.shape[0]
    h_pad, dout_pad = w2t.shape

    cd_size = jnp.dtype(compute_dtype).itemsize
    out_size = jnp.dtype(out_dtype).itemsize
    sub = max(_sublane(compute_dtype), _sublane(out_dtype))

    vmem_limit = _vmem_limit_bytes()
    if tm_req is None:
        # Roofline-derived row tile: ~640 on 128 MiB parts, ~512 on v7x.
        tm_req = 640 if _vmem_capacity_bytes() > 64 * 1024 * 1024 else 512
    use_acc_scratch = jnp.dtype(out_dtype) != jnp.dtype(jnp.float32)
    tm, m_pad = _pick_tm(m, d_pad, dout_pad, th, sub, cd_size, out_size,
                         int(0.9 * vmem_limit), use_acc_scratch, tm_req)

    # Fast path: skip the activation padding copy when already aligned.
    if m_pad == m and d_pad == d:
        xp = x2d
    else:
        xp = jnp.zeros((m_pad, d_pad), compute_dtype).at[:m, :d].set(x2d)

    n_i = m_pad // tm
    n_j = h_pad // th

    flops = 2 * m_pad * d_pad * (2 * h_pad) + 2 * m_pad * h_pad * dout_pad
    # Weights are re-streamed from HBM once per M tile.
    bytes_accessed = (
        xp.size * cd_size
        + n_i * (w1f.size + w2t.size) * cd_size
        + m_pad * dout_pad * out_size
    )

    scratch_shapes = (
        [pltpu.VMEM((tm, dout_pad), jnp.float32)] if use_acc_scratch else []
    )

    out2d = pl.pallas_call(
        _gated_mlp_kernel,
        out_shape=jax.ShapeDtypeStruct((m_pad, dout_pad), out_dtype),
        grid_spec=pltpu.PrefetchScalarGridSpec(
            num_scalar_prefetch=0,
            grid=(n_i, n_j),                          # H (reduction) axis last
            in_specs=[
                pl.BlockSpec((tm, d_pad), lambda i, j: (i, 0)),
                pl.BlockSpec((d_pad, 2 * th), lambda i, j: (0, j)),
                pl.BlockSpec((th, dout_pad), lambda i, j: (j, 0)),
            ],
            out_specs=pl.BlockSpec((tm, dout_pad), lambda i, j: (i, 0)),
            scratch_shapes=scratch_shapes,
        ),
        compiler_params=pltpu.CompilerParams(
            dimension_semantics=("parallel", "arbitrary"),
            vmem_limit_bytes=int(vmem_limit),
        ),
        cost_estimate=pl.CostEstimate(
            flops=int(flops),
            transcendentals=int(m_pad * h_pad),
            bytes_accessed=int(bytes_accessed),
        ),
    )(xp, w1f, w2t)

    return out2d[:m, :d_out].reshape(*orig_shape[:-1], d_out)


def make_gated_mlp(w1, w2, *, tm=None, th=None, compute_dtype=None):
    """Pack the weights once and return a jit-compiled apply(x) closure.

    w1: (2H, D) fc1 weight, w2: (Dout, H) fc2 weight (bias=False).
    compute_dtype=jnp.bfloat16 halves weight traffic / VMEM for the matmuls
    (accumulation and gating stay f32).
    """
    w1f, w2t, meta = pack_gated_mlp_weights(
        w1, w2, th_req=th, compute_dtype=compute_dtype
    )
    w1f = jax.device_put(w1f)
    w2t = jax.device_put(w2t)

    @jax.jit
    def apply(x):
        return _gated_mlp_packed(x, w1f, w2t, tm_req=tm, **meta)

    return apply


def gated_mlp(x, w1, w2, *, tm=None, th=None, compute_dtype=None):
    """Convenience wrapper (re-packs weights every call; prefer make_gated_mlp)."""
    w1f, w2t, meta = pack_gated_mlp_weights(
        w1, w2, th_req=th, compute_dtype=compute_dtype
    )
    return _gated_mlp_packed(x, w1f, w2t, tm_req=tm, **meta)


# TODO(synk): for very large Dout (>=8-16K) on v7x a Dout grid axis (accepting
# fc1 recompute) would keep the acc/w2t blocks small; not needed at these sizes.


# --------------------------------- reference ---------------------------------

def _reference(x, w1, w2):
    y = x @ w1.T
    h = w1.shape[0] // 2
    val, gate = y[..., :h], y[..., h:]
    return (val * jax.nn.silu(gate)) @ w2.T


if __name__ == "__main__":
    # Module hyperparams matching GatedMLP(in_features=32):
    in_features = 32
    hidden = int(8 * in_features / 3)                                 # 85
    multiple_of = 128
    hidden = (hidden + multiple_of - 1) // multiple_of * multiple_of  # -> 128
    out_features = in_features                                        # 32
    batch, seq = 2, 8                                                 # M = 16 rows

    key = jax.random.PRNGKey(0)
    kx, k1, k2 = jax.random.split(key, 3)
    x = jax.random.normal(kx, (batch, seq, in_features), dtype=jnp.float32)
    # PyTorch Linear weight shapes, bias=False.
    w1 = jax.random.normal(k1, (2 * hidden, in_features), dtype=jnp.float32) * 0.05
    w2 = jax.random.normal(k2, (out_features, hidden), dtype=jnp.float32) * 0.05

    mlp = make_gated_mlp(w1, w2)   # weight packing hoisted out of the hot path
    out = mlp(x)
    jax.block_until_ready(out)

    ref = _reference(x, w1, w2)
    assert out.shape == (batch, seq, out_features)
    assert jnp.allclose(out, ref, atol=1e-4, rtol=1e-4), "mismatch vs reference"

    print("KERNEL_OK")
</pallas_src>

<mosaic_0001>
module attributes {stable_mosaic.version = 11 : i64} {
  func.func @_gated_mlp_kernel(%arg0: i32, %arg1: i32, %arg2: memref<16x128xf32, #tpu.memory_space<vmem>>, %arg3: memref<128x256xf32, #tpu.memory_space<vmem>>, %arg4: memref<128x128xf32, #tpu.memory_space<vmem>>, %arg5: memref<16x128xf32, #tpu.memory_space<vmem>>) attributes {dimension_semantics = [#tpu.dimension_semantics<parallel>, #tpu.dimension_semantics<arbitrary>], iteration_bounds = array<i64: 1, 1>, scalar_prefetch = 0 : i64, scratch_operands = 0 : i64, tpu.core_type = #tpu.core_type<tc>, window_params = [{transform_indices = @transform_0, window_bounds = array<i64: 16, 128>}, {transform_indices = @transform_1, window_bounds = array<i64: 128, 256>}, {transform_indices = @transform_2, window_bounds = array<i64: 128, 128>}, {transform_indices = @transform_3, window_bounds = array<i64: 16, 128>}]} {
    %c0_i32 = arith.constant 0 : i32
    %0 = arith.cmpi eq, %arg1, %c0_i32 : i32
    %1 = arith.extui %0 : i1 to i32
    %c0_i32_0 = arith.constant 0 : i32
    %2 = arith.cmpi ne, %1, %c0_i32_0 : i32
    scf.if %2 {
      %cst_12 = arith.constant 0.000000e+00 : f32
      %20 = vector.broadcast %cst_12 : f32 to vector<16x128xf32>
      %c0_13 = arith.constant 0 : index
      %c0_14 = arith.constant 0 : index
      %21 = vector.load %arg5[%c0_13, %c0_14] : memref<16x128xf32, #tpu.memory_space<vmem>>, vector<16x128xf32>
      tpu.vector_store %arg5[%c0_13, %c0_14], %20 {strides = array<i32>} : memref<16x128xf32, #tpu.memory_space<vmem>>, vector<16x128xf32>,
    } else {
    }
    %c0 = arith.constant 0 : index
    %c0_1 = arith.constant 0 : index
    %3 = vector.load %arg2[%c0, %c0_1] : memref<16x128xf32, #tpu.memory_space<vmem>>, vector<16x128xf32>
    %c0_2 = arith.constant 0 : index
    %c0_3 = arith.constant 0 : index
    %4 = vector.load %arg3[%c0_2, %c0_3] : memref<128x256xf32, #tpu.memory_space<vmem>>, vector<128x256xf32>
    %cst = arith.constant dense<0.000000e+00> : vector<16x256xf32>
    %5 = tpu.matmul %3, %4, %cst {dimension_numbers = #tpu.dot_dimension_numbers<[1], [0], [0], [1], [0, 0, 1, 1], [], []>} : vector<16x128xf32>, vector<128x256xf32>, vector<16x256xf32> -> vector<16x256xf32>
    %6 = vector.extract_strided_slice %5 {offsets = [0, 0], sizes = [16, 128], strides = [1, 1]} : vector<16x256xf32> to vector<16x128xf32>
    %7 = vector.extract_strided_slice %5 {offsets = [0, 128], sizes = [16, 128], strides = [1, 1]} : vector<16x256xf32> to vector<16x128xf32>
    %8 = arith.negf %7 : vector<16x128xf32>
    %9 = math.exp %8 : vector<16x128xf32>
    %cst_4 = arith.constant 1.000000e+00 : f32
    %10 = vector.broadcast %cst_4 : f32 to vector<16x128xf32>
    %11 = arith.addf %10, %9 : vector<16x128xf32>
    %12 = arith.divf %10, %11 : vector<16x128xf32>
    %13 = arith.mulf %7, %12 : vector<16x128xf32>
    %14 = arith.mulf %6, %13 : vector<16x128xf32>
    %c0_5 = arith.constant 0 : index
    %c0_6 = arith.constant 0 : index
    %15 = vector.load %arg5[%c0_5, %c0_6] : memref<16x128xf32, #tpu.memory_space<vmem>>, vector<16x128xf32>
    %c0_7 = arith.constant 0 : index
    %c0_8 = arith.constant 0 : index
    %16 = vector.load %arg4[%c0_7, %c0_8] : memref<128x128xf32, #tpu.memory_space<vmem>>, vector<128x128xf32>
    %cst_9 = arith.constant dense<0.000000e+00> : vector<16x128xf32>
    %17 = tpu.matmul %14, %16, %cst_9 {dimension_numbers = #tpu.dot_dimension_numbers<[1], [0], [0], [1], [0, 0, 1, 1], [], []>} : vector<16x128xf32>, vector<128x128xf32>, vector<16x128xf32> -> vector<16x128xf32>
    %18 = arith.addf %15, %17 : vector<16x128xf32>
    %c0_10 = arith.constant 0 : index
    %c0_11 = arith.constant 0 : index
    %19 = vector.load %arg5[%c0_10, %c0_11] : memref<16x128xf32, #tpu.memory_space<vmem>>, vector<16x128xf32>
    tpu.vector_store %arg5[%c0_10, %c0_11], %18 {strides = array<i32>} : memref<16x128xf32, #tpu.memory_space<vmem>>, vector<16x128xf32>,
    return
  }
  func.func @transform_0(%arg0: i32, %arg1: i32) -> (i32, i32) {
    %c0_i32 = arith.constant 0 : i32
    %c0_i32_0 = arith.constant 0 : i32
    return %arg0, %c0_i32 : i32, i32
  }
  func.func @transform_1(%arg0: i32, %arg1: i32) -> (i32, i32) {
    %c0_i32 = arith.constant 0 : i32
    %c0_i32_0 = arith.constant 0 : i32
    return %c0_i32, %arg1 : i32, i32
  }
  func.func @transform_2(%arg0: i32, %arg1: i32) -> (i32, i32) {
    %c0_i32 = arith.constant 0 : i32
    %c0_i32_0 = arith.constant 0 : i32
    return %arg1, %c0_i32 : i32, i32
  }
  func.func @transform_3(%arg0: i32, %arg1: i32) -> (i32, i32) {
    %c0_i32 = arith.constant 0 : i32
    %c0_i32_0 = arith.constant 0 : i32
    return %arg0, %c0_i32 : i32, i32
  }
}

</mosaic_0001>

<llo_original>
// kernel: apply.1
$region0: #{apply.1}
  #allocation0 [shape = 'u32[]', space=smem, size = 0x4, offset = 0x4, fixed_abs, tag = 'smem constant byte address 0x4 - core index']
  #allocation1 [shape = 'u32[144,128]{1,0:T(1,128)}', space=vmem, size = 0x12000, scoped, tag = 'internal scratch']
  %s0 = inlined_call_operand.vmem [shape: f32[16,128], index: 0, kind: input, shape index: {}]
  %s1 = inlined_call_operand.hbm [shape: f32[128,256], index: 1, kind: input, shape index: {}]
  %s2 = inlined_call_operand.hbm [shape: f32[128,128], index: 2, kind: input, shape index: {}]
  %s3 = inlined_call_operand.vmem [shape: f32[16,128], index: 3, kind: output, shape index: {}]
  %s4 = sld [smem:[#allocation0]]
  $region34: #{apply.1} parent=0
    _
  %s6 = ssub.s32 1, %s4
  %s7 = scalar_select 0, %s6, %s4
  $region1: #{apply.1} parent=0
    #allocation2 [shape = 'u8[131072]{0}', space=vmem, size = 0x20000, scoped, tag = 'input window, operand 1, single buffered']
    #allocation3 [shape = 's32[1]{0}', space=sflag, size = 0x4, scoped, tag = 'scoped memory for apply.1']
    #allocation4 [shape = 'u8[65536]{0}', space=vmem, size = 0x10000, scoped, tag = 'input window, operand 2, single buffered']
    #allocation5 [shape = 's32[1]{0}', space=sflag, size = 0x4, scoped, tag = 'scoped memory for apply.1']
    %8 = vsyncpa [#allocation3], 0
    %9 = vsyncpa [#allocation5], 0
    // Predicated region
    $region2: #{apply.1} parent=1 // pred_check
      _
    $region3: #{apply.1} parent=1 // pred_check_branch
      %11 = sbr.rel (0) target = $region5
    $region4: #{apply.1} parent=1 // pred_region
      _
    $region5: #{apply.1} parent=1 // pred_fallthru
      _
    // Predicated region
    $region6: #{apply.1} parent=1 // pred_check
      _
    $region7: #{apply.1} parent=1 // pred_check_branch
      %13 = sbr.rel (0) target = $region9
    $region8: #{apply.1} parent=1 // pred_region
      %s15 = ssub.s32 4096, 4096
      %16 = vsyncadd [#allocation3], %s15
      %s17 = sshll.u32 [#allocation2], 4
      %s18 = int_to_ptr.vmem [resolvable:$true] %s17
      %23 = dma.hbm_to_vmem [thread:$0]  %s1, 4096, %s18, [#allocation3], 256, 256, 16
    $region9: #{apply.1} parent=1 // pred_fallthru
      _
    // Predicated region
    $region10: #{apply.1} parent=1 // pred_check
      _
    $region11: #{apply.1} parent=1 // pred_check_branch
      %25 = sbr.rel (0) target = $region13
    $region12: #{apply.1} parent=1 // pred_region
      %s27 = ssub.s32 2048, 2048
      %28 = vsyncadd [#allocation5], %s27
      %s29 = sshll.u32 [#allocation4], 4
      %s30 = int_to_ptr.vmem [resolvable:$true] %s29
      %35 = dma.hbm_to_vmem [thread:$0]  %s2, 2048, %s30, [#allocation5], 128, 128, 8
    $region13: #{apply.1} parent=1 // pred_fallthru
      _
    // Predicated region
    $region14: #{apply.1} parent=1 // pred_check
      _
    $region15: #{apply.1} parent=1 // pred_check_branch
      %37 = sbr.rel (0) target = $region17
    $region16: #{apply.1} parent=1 // pred_region
      %38 = dma.done [#allocation3], 4096
    $region17: #{apply.1} parent=1 // pred_fallthru
      _
    // Predicated region
    $region18: #{apply.1} parent=1 // pred_check
      _
    $region19: #{apply.1} parent=1 // pred_check_branch
      %40 = sbr.rel (0) target = $region21
    $region20: #{apply.1} parent=1 // pred_region
      %41 = dma.done [#allocation5], 2048
    $region21: #{apply.1} parent=1 // pred_fallthru
      _
    %p42 = scmp.eq.s32.totalorder 0, 0
    // Predicated region
    $region22: #{apply.1} parent=1 // pred_check
      %p43 = pneg %p42
    $region23: #{apply.1} parent=1 // pred_check_branch
      %45 = sbr.rel (%p43) target = $region25
    $region24: #{apply.1} parent=1 // pred_region
      %46 = vst [vmem:[%s3] sm:$0xff] 0.0
      %47 = vst [vmem:[%s3 + $0x8] sm:$0xff] 0.0
    $region25: #{apply.1} parent=1 // pred_fallthru
      _
    %v48 = vld [vmem:[%s0] sm:$0xff]
    %v49 = vld [vmem:[%s0 + $0x8] sm:$0xff]
    %v50 = vld [vmem:[#allocation2] sm:$0xff]
    %v51 = vld [vmem:[#allocation2 + $0x8] sm:$0xff]
    %v52 = vld [vmem:[#allocation2 + $0x10] sm:$0xff]
    %v53 = vld [vmem:[#allocation2 + $0x18] sm:$0xff]
    %v54 = vld [vmem:[#allocation2 + $0x20] sm:$0xff]
    %v55 = vld [vmem:[#allocation2 + $0x28] sm:$0xff]
    %v56 = vld [vmem:[#allocation2 + $0x30] sm:$0xff]
    %v57 = vld [vmem:[#allocation2 + $0x38] sm:$0xff]
    %v58 = vld [vmem:[#allocation2 + $0x40] sm:$0xff]
    %v59 = vld [vmem:[#allocation2 + $0x48] sm:$0xff]
    %v60 = vld [vmem:[#allocation2 + $0x50] sm:$0xff]
    %v61 = vld [vmem:[#allocation2 + $0x58] sm:$0xff]
    %v62 = vld [vmem:[#allocation2 + $0x60] sm:$0xff]
    %v63 = vld [vmem:[#allocation2 + $0x68] sm:$0xff]
    %v64 = vld [vmem:[#allocation2 + $0x70] sm:$0xff]
    %v65 = vld [vmem:[#allocation2 + $0x78] sm:$0xff]
    %v66 = vld [vmem:[#allocation2 + $0x80] sm:$0xff]
    %v67 = vld [vmem:[#allocation2 + $0x88] sm:$0xff]
    %v68 = vld [vmem:[#allocation2 + $0x90] sm:$0xff]
    %v69 = vld [vmem:[#allocation2 + $0x98] sm:$0xff]
    %v70 = vld [vmem:[#allocation2 + $0xa0] sm:$0xff]
    %v71 = vld [vmem:[#allocation2 + $0xa8] sm:$0xff]
    %v72 = vld [vmem:[#allocation2 + $0xb0] sm:$0xff]
    %v73 = vld [vmem:[#allocation2 + $0xb8] sm:$0xff]
    %v74 = vld [vmem:[#allocation2 + $0xc0] sm:$0xff]
    %v75 = vld [vmem:[#allocation2 + $0xc8] sm:$0xff]
    %v76 = vld [vmem:[#allocation2 + $0xd0] sm:$0xff]
    %v77 = vld [vmem:[#allocation2 + $0xd8] sm:$0xff]
    %v78 = vld [vmem:[#allocation2 + $0xe0] sm:$0xff]
    %v79 = vld [vmem:[#allocation2 + $0xe8] sm:$0xff]
    %v80 = vld [vmem:[#allocation2 + $0xf0] sm:$0xff]
    %v81 = vld [vmem:[#allocation2 + $0xf8] sm:$0xff]
    %82 = vmatprep.subr.mxu0 %v81
    %83 = vmatpush1.msra.mxu0 %v80
    %84 = vmatprep.subr.mxu0 %v79
    %85 = vmatpush1.msra.mxu0 %v78
    %86 = vmatprep.subr.mxu0 %v77
    %87 = vmatpush1.msra.mxu0 %v76
    %88 = vmatprep.subr.mxu0 %v75
    %89 = vmatpush1.msra.mxu0 %v74
    %90 = vmatprep.subr.mxu0 %v73
    %91 = vmatpush1.msra.mxu0 %v72
    %92 = vmatprep.subr.mxu0 %v71
    %93 = vmatpush1.msra.mxu0 %v70
    %94 = vmatprep.subr.mxu0 %v69
    %95 = vmatpush1.msra.mxu0 %v68
    %96 = vmatprep.subr.mxu0 %v67
    %97 = vmatpush1.msra.mxu0 %v66
    %98 = vmatprep.subr.mxu0 %v65
    %99 = vmatpush1.msra.mxu0 %v64
    %100 = vmatprep.subr.mxu0 %v63
    %101 = vmatpush1.msra.mxu0 %v62
    %102 = vmatprep.subr.mxu0 %v61
    %103 = vmatpush1.msra.mxu0 %v60
    %104 = vmatprep.subr.mxu0 %v59
    %105 = vmatpush1.msra.mxu0 %v58
    %106 = vmatprep.subr.mxu0 %v57
    %107 = vmatpush1.msra.mxu0 %v56
    %108 = vmatprep.subr.mxu0 %v55
    %109 = vmatpush1.msra.mxu0 %v54
    %110 = vmatprep.subr.mxu0 %v53
    %111 = vmatpush1.msra.mxu0 %v52
    %112 = vmatprep.subr.mxu0 %v51
    %113 = vmatpush1.msra.mxu0 %v50
    %114 = vmatprep.subr.mxu0 0.0
    %115 = vmatpush2.msra.mxu0 0.0
    %116 = vmatprep.subr.mxu0 0.0
    %117 = vmatpush2.msra.mxu0 0.0
    %118 = vmatprep.subr.mxu0 0.0
    %119 = vmatpush2.msra.mxu0 0.0
    %120 = vmatprep.subr.mxu0 0.0
    %121 = vmatpush2.msra.mxu0 0.0
    %122 = vmatprep.subr.mxu0 0.0
    %123 = vmatpush2.msra.mxu0 0.0
    %124 = vmatprep.subr.mxu0 0.0
    %125 = vmatpush2.msra.mxu0 0.0
    %126 = vmatprep.subr.mxu0 0.0
    %127 = vmatpush2.msra.mxu0 0.0
    %128 = vmatprep.subr.mxu0 0.0
    %129 = vmatpush2.msra.mxu0 0.0
    %130 = vmatprep.subr.mxu0 0.0
    %131 = vmatpush2.msra.mxu0 0.0
    %132 = vmatprep.subr.mxu0 0.0
    %133 = vmatpush2.msra.mxu0 0.0
    %134 = vmatprep.subr.mxu0 0.0
    %135 = vmatpush2.msra.mxu0 0.0
    %136 = vmatprep.subr.mxu0 0.0
    %137 = vmatpush2.msra.mxu0 0.0
    %138 = vmatprep.subr.mxu0 0.0
    %139 = vmatpush2.msra.mxu0 0.0
    %140 = vmatprep.subr.mxu0 0.0
    %141 = vmatpush2.msra.mxu0 0.0
    %142 = vmatprep.subr.mxu0 0.0
    %143 = vmatpush2.msra.mxu0 0.0
    %144 = vmatprep.subr.mxu0 0.0
    %145 = vmatpush2.msra.mxu0 0.0
    %146 = vmatprep.mubr.f32.mxu0 0.0
    %147 = vmatmul.mubr.f32.gmra.mxu0 %v48
    %v148 = vpop.f32.mrf.mxu0
    %v149 = vadd.f32 0.0, %v148
    %v150 = vpop.f32.mrf.mxu0
    %v151 = vadd.f32 0.0, %v150
    %152 = vmatprep.mubr.f32.mxu0 0.0
    %153 = vmatmul.mubr.f32.gmra.mxu0 %v49
    %v154 = vpop.f32.mrf.mxu0
    %v155 = vadd.f32 0.0, %v154
    %v156 = vpop.f32.mrf.mxu0
    %v157 = vadd.f32 0.0, %v156
    %158 = vdwg.mxu0
    %v159 = vxor.u32 %v151, 2147483648
    %v160 = vxor.u32 %v157, 2147483648
    %v161 = vmul.f32 %v159, 1.442695
    %v162 = vpow.pop %v161
    %v163 = vmul.f32 %v160, 1.442695
    %v164 = vpow.pop %v163
    %v165 = vadd.f32 %v162, 1.0
    %v166 = vadd.f32 %v164, 1.0
    %v167 = vrcp.pop %v165
    %v168 = vmul.f32 1.0, %v167
    %v169 = vrcp.pop %v166
    %v170 = vmul.f32 1.0, %v169
    %v171 = vmul.f32 %v151, %v168
    %v172 = vmul.f32 %v157, %v170
    %v173 = vmul.f32 %v149, %v171
    %v174 = vmul.f32 %v155, %v172
    %v175 = vld [vmem:[%s3] sm:$0xff]
    %v176 = vld [vmem:[%s3 + $0x8] sm:$0xff]
    %v177 = vld [vmem:[#allocation4] sm:$0xff]
    %v178 = vld [vmem:[#allocation4 + $0x8] sm:$0xff]
    %v179 = vld [vmem:[#allocation4 + $0x10] sm:$0xff]
    %v180 = vld [vmem:[#allocation4 + $0x18] sm:$0xff]
    %v181 = vld [vmem:[#allocation4 + $0x20] sm:$0xff]
    %v182 = vld [vmem:[#allocation4 + $0x28] sm:$0xff]
    %v183 = vld [vmem:[#allocation4 + $0x30] sm:$0xff]
    %v184 = vld [vmem:[#allocation4 + $0x38] sm:$0xff]
    %v185 = vld [vmem:[#allocation4 + $0x40] sm:$0xff]
    %v186 = vld [vmem:[#allocation4 + $0x48] sm:$0xff]
    %v187 = vld [vmem:[#allocation4 + $0x50] sm:$0xff]
    %v188 = vld [vmem:[#allocation4 + $0x58] sm:$0xff]
    %v189 = vld [vmem:[#allocation4 + $0x60] sm:$0xff]
    %v190 = vld [vmem:[#allocation4 + $0x68] sm:$0xff]
    %v191 = vld [vmem:[#allocation4 + $0x70] sm:$0xff]
    %v192 = vld [vmem:[#allocation4 + $0x78] sm:$0xff]
    %193 = vmatprep.subr.mxu0 0.0
    %194 = vmatpush1.msra.mxu0 %v192
    %195 = vmatprep.subr.mxu0 0.0
    %196 = vmatpush1.msra.mxu0 %v191
    %197 = vmatprep.subr.mxu0 0.0
    %198 = vmatpush1.msra.mxu0 %v190
    %199 = vmatprep.subr.mxu0 0.0
    %200 = vmatpush1.msra.mxu0 %v189
    %201 = vmatprep.subr.mxu0 0.0
    %202 = vmatpush1.msra.mxu0 %v188
    %203 = vmatprep.subr.mxu0 0.0
    %204 = vmatpush1.msra.mxu0 %v187
    %205 = vmatprep.subr.mxu0 0.0
    %206 = vmatpush1.msra.mxu0 %v186
    %207 = vmatprep.subr.mxu0 0.0
    %208 = vmatpush1.msra.mxu0 %v185
    %209 = vmatprep.subr.mxu0 0.0
    %210 = vmatpush1.msra.mxu0 %v184
    %211 = vmatprep.subr.mxu0 0.0
    %212 = vmatpush1.msra.mxu0 %v183
    %213 = vmatprep.subr.mxu0 0.0
    %214 = vmatpush1.msra.mxu0 %v182
    %215 = vmatprep.subr.mxu0 0.0
    %216 = vmatpush1.msra.mxu0 %v181
    %217 = vmatprep.subr.mxu0 0.0
    %218 = vmatpush1.msra.mxu0 %v180
    %219 = vmatprep.subr.mxu0 0.0
    %220 = vmatpush1.msra.mxu0 %v179
    %221 = vmatprep.subr.mxu0 0.0
    %222 = vmatpush1.msra.mxu0 %v178
    %223 = vmatprep.subr.mxu0 0.0
    %224 = vmatpush1.msra.mxu0 %v177
    %225 = vmatprep.subr.mxu0 0.0
    %226 = vmatpush2.msra.mxu0 0.0
    %227 = vmatprep.subr.mxu0 0.0
    %228 = vmatpush2.msra.mxu0 0.0
    %229 = vmatprep.subr.mxu0 0.0
    %230 = vmatpush2.msra.mxu0 0.0
    %231 = vmatprep.subr.mxu0 0.0
    %232 = vmatpush2.msra.mxu0 0.0
    %233 = vmatprep.subr.mxu0 0.0
    %234 = vmatpush2.msra.mxu0 0.0
    %235 = vmatprep.subr.mxu0 0.0
    %236 = vmatpush2.msra.mxu0 0.0
    %237 = vmatprep.subr.mxu0 0.0
    %238 = vmatpush2.msra.mxu0 0.0
    %239 = vmatprep.subr.mxu0 0.0
    %240 = vmatpush2.msra.mxu0 0.0
    %241 = vmatprep.subr.mxu0 0.0
    %242 = vmatpush2.msra.mxu0 0.0
    %243 = vmatprep.subr.mxu0 0.0
    %244 = vmatpush2.msra.mxu0 0.0
    %245 = vmatprep.subr.mxu0 0.0
    %246 = vmatpush2.msra.mxu0 0.0
    %247 = vmatprep.subr.mxu0 0.0
    %248 = vmatpush2.msra.mxu0 0.0
    %249 = vmatprep.subr.mxu0 0.0
    %250 = vmatpush2.msra.mxu0 0.0
    %251 = vmatprep.subr.mxu0 0.0
    %252 = vmatpush2.msra.mxu0 0.0
    %253 = vmatprep.subr.mxu0 0.0
    %254 = vmatpush2.msra.mxu0 0.0
    %255 = vmatprep.subr.mxu0 0.0
    %256 = vmatpush2.msra.mxu0 0.0
    %257 = vmatprep.mubr.f32.mxu0 0.0
    %258 = vmatmul.mubr.f32.gmra.mxu0 %v173
    %v259 = vpop.f32.mrf.mxu0
    %v260 = vadd.f32 0.0, %v259
    %v261 = vpop.f32.mrf.mxu0
    %262 = vmatprep.mubr.f32.mxu0 0.0
    %263 = vmatmul.mubr.f32.gmra.mxu0 %v174
    %v264 = vpop.f32.mrf.mxu0
    %v265 = vadd.f32 0.0, %v264
    %v266 = vpop.f32.mrf.mxu0
    %267 = vdwg.mxu0
    %v268 = vadd.f32 %v175, %v260
    %v269 = vadd.f32 %v176, %v265
    %270 = vst [vmem:[%s3] sm:$0xff] %v268
    %271 = vst [vmem:[%s3 + $0x8] sm:$0xff] %v269
    // Predicated region
    $region26: #{apply.1} parent=1 // pred_check
      _
    $region27: #{apply.1} parent=1 // pred_check_branch
      %273 = sbr.rel (0) target = $region29
    $region28: #{apply.1} parent=1 // pred_region
      _
    $region29: #{apply.1} parent=1 // pred_fallthru
      _
    // Predicated region
    $region30: #{apply.1} parent=1 // pred_check
      _
    $region31: #{apply.1} parent=1 // pred_check_branch
      %275 = sbr.rel (0) target = $region33
    $region32: #{apply.1} parent=1 // pred_region
      _
    $region33: #{apply.1} parent=1 // pred_fallthru
      _
    %276 = vsyncpa [#allocation3], 1
    %277 = vsyncpa [#allocation5], 1

</llo_original>
